<compile_context>
chip_gen: v7x
topology: tpu7x:2x2x1
jax: 0.10.0
libtpu: 0.0.40
codegen_flags: <defaults>
</compile_context>

<pallas_src>
import jax
import jax.numpy as jnp
from jax.experimental import pallas as pl
from jax.experimental.pallas import tpu as pltpu


def _masked_diffusion_kernel(x_ref, noise_ref, a_ref, c_ref, o_ref):
    # x_ref / noise_ref: (1, TS, D); a_ref / c_ref: (1, TS, 1); all coefficients f32.
    x = x_ref[...].astype(jnp.float32)
    n = noise_ref[...].astype(jnp.float32)
    o_ref[...] = (x * a_ref[...] + n * c_ref[...]).astype(o_ref.dtype)


def _pick_seq_tile(S, D, itemsize, target_bytes=2 << 20):
    """Pick a seq tile so one (1, TS, D) input tile is ~target_bytes.

    Keeps TS a multiple of 8 (sublanes) and prefers a divisor of S so there is
    no padded tail block; falls back to full S for small sequences.
    """
    if S <= 8:
        return S
    rows = max(8, target_bytes // max(1, D * itemsize))
    if rows >= S:
        return S
    rows = max(8, (rows // 8) * 8)
    for t in range(rows, 7, -8):          # prefer an even split of S
        if S % t == 0:
            return t
    return rows                           # partial tail block; Pallas masks writes


def masked_forward_diffusion(x, steps, mask, noise, max_steps):
    """Functional equivalent of MaskedForwardDiffusion.forward.

    x:     (B, S, D) float32 / bfloat16
    steps: (B,)      int or float
    mask:  (B, S)    bool
    noise: (B, S, D) same dtype family as x (stands in for torch.randn_like(X))
    """
    B, S, D = x.shape
    assert max_steps != 0, "max_steps must be non-zero"

    # Fold steps + mask into two per-(b, s) blend coefficients (tiny HBM cost
    # vs. the B*S*D streams): o = x*a + n*c.
    ni = 1.0 - steps.astype(jnp.float32) / float(max_steps)          # (B,)
    ni = 1.0 - jnp.cos(jnp.pi * ni * 0.5)                            # (B,)
    ni = ni[:, None]                                                 # (B, 1)
    a = jnp.where(mask, ni, 1.0).astype(jnp.float32)[..., None]      # (B, S, 1)
    c = jnp.where(mask, 1.0 - ni, 0.0).astype(jnp.float32)[..., None]

    TS = _pick_seq_tile(S, D, jnp.dtype(x.dtype).itemsize)
    grid = (B, pl.cdiv(S, TS))

    grid_spec = pltpu.PrefetchScalarGridSpec(
        num_scalar_prefetch=0,
        grid=grid,
        in_specs=[
            pl.BlockSpec((1, TS, D), lambda b, s: (b, s, 0)),   # X
            pl.BlockSpec((1, TS, D), lambda b, s: (b, s, 0)),   # noise
            pl.BlockSpec((1, TS, 1), lambda b, s: (b, s, 0)),   # a coeff
            pl.BlockSpec((1, TS, 1), lambda b, s: (b, s, 0)),   # c coeff
        ],
        out_specs=pl.BlockSpec((1, TS, D), lambda b, s: (b, s, 0)),
    )

    return pl.pallas_call(
        _masked_diffusion_kernel,
        out_shape=jax.ShapeDtypeStruct((B, S, D), x.dtype),
        grid_spec=grid_spec,
        compiler_params=pltpu.CompilerParams(
            dimension_semantics=("parallel", "parallel"),
        ),
    )(x, noise, a, c)


def _reference(x, steps, mask, noise, max_steps):
    ni = 1.0 - (steps.astype(jnp.float32) / max_steps)
    ni = 1.0 - jnp.cos(jnp.pi * ni / 2.0)
    ni = ni[:, None, None]
    blended = x.astype(jnp.float32) * ni + noise.astype(jnp.float32) * (1.0 - ni)
    return jnp.where(mask[:, :, None], blended, x.astype(jnp.float32)).astype(x.dtype)


if __name__ == "__main__":
    B, S, D = 2, 8, 32
    max_steps = 10

    key = jax.random.PRNGKey(0)
    kx, kn, km, ks = jax.random.split(key, 4)

    x = jax.random.normal(kx, (B, S, D), dtype=jnp.float32)
    steps = jax.random.randint(ks, (B,), 0, max_steps + 1, dtype=jnp.int32)
    mask = jax.random.bernoulli(km, 0.5, (B, S))
    noise = jax.random.normal(kn, (B, S, D), dtype=jnp.float32)

    out = masked_forward_diffusion(x, steps, mask, noise, max_steps)
    out = jax.block_until_ready(out)

    ref = _reference(x, steps, mask, noise, max_steps)
    assert out.shape == (B, S, D) and out.dtype == jnp.float32
    assert jnp.allclose(out, ref, atol=1e-5, rtol=1e-5), "mismatch vs reference"

    print("KERNEL_OK")
</pallas_src>

<mosaic_0001>
module attributes {stable_mosaic.version = 11 : i64} {
  func.func @_masked_diffusion_kernel(%arg0: i32, %arg1: i32, %arg2: memref<1x8x32xf32, #tpu.memory_space<vmem>>, %arg3: memref<1x8x32xf32, #tpu.memory_space<vmem>>, %arg4: memref<1x8x1xf32, #tpu.memory_space<vmem>>, %arg5: memref<1x8x1xf32, #tpu.memory_space<vmem>>, %arg6: memref<1x8x32xf32, #tpu.memory_space<vmem>>) attributes {dimension_semantics = [#tpu.dimension_semantics<parallel>, #tpu.dimension_semantics<parallel>], iteration_bounds = array<i64: 2, 1>, scalar_prefetch = 0 : i64, scratch_operands = 0 : i64, tpu.core_type = #tpu.core_type<tc>, window_params = [{transform_indices = @transform_0, window_bounds = array<i64: 1, 8, 32>}, {transform_indices = @transform_1, window_bounds = array<i64: 1, 8, 32>}, {transform_indices = @transform_2, window_bounds = array<i64: 1, 8, 1>}, {transform_indices = @transform_3, window_bounds = array<i64: 1, 8, 1>}, {transform_indices = @transform_4, window_bounds = array<i64: 1, 8, 32>}]} {
    %c0 = arith.constant 0 : index
    %c0_0 = arith.constant 0 : index
    %c0_1 = arith.constant 0 : index
    %0 = vector.load %arg2[%c0, %c0_0, %c0_1] : memref<1x8x32xf32, #tpu.memory_space<vmem>>, vector<1x8x32xf32>
    %c0_2 = arith.constant 0 : index
    %c0_3 = arith.constant 0 : index
    %c0_4 = arith.constant 0 : index
    %1 = vector.load %arg3[%c0_2, %c0_3, %c0_4] : memref<1x8x32xf32, #tpu.memory_space<vmem>>, vector<1x8x32xf32>
    %c0_5 = arith.constant 0 : index
    %c0_6 = arith.constant 0 : index
    %c0_7 = arith.constant 0 : index
    %2 = vector.load %arg4[%c0_5, %c0_6, %c0_7] : memref<1x8x1xf32, #tpu.memory_space<vmem>>, vector<1x8x1xf32>
    %3 = vector.broadcast %2 : vector<1x8x1xf32> to vector<1x8x32xf32>
    %4 = arith.mulf %0, %3 : vector<1x8x32xf32>
    %c0_8 = arith.constant 0 : index
    %c0_9 = arith.constant 0 : index
    %c0_10 = arith.constant 0 : index
    %5 = vector.load %arg5[%c0_8, %c0_9, %c0_10] : memref<1x8x1xf32, #tpu.memory_space<vmem>>, vector<1x8x1xf32>
    %6 = vector.broadcast %5 : vector<1x8x1xf32> to vector<1x8x32xf32>
    %7 = arith.mulf %1, %6 : vector<1x8x32xf32>
    %8 = arith.addf %4, %7 : vector<1x8x32xf32>
    %c0_11 = arith.constant 0 : index
    %c0_12 = arith.constant 0 : index
    %c0_13 = arith.constant 0 : index
    %9 = vector.load %arg6[%c0_11, %c0_12, %c0_13] : memref<1x8x32xf32, #tpu.memory_space<vmem>>, vector<1x8x32xf32>
    tpu.vector_store %arg6[%c0_11, %c0_12, %c0_13], %8 {strides = array<i32>} : memref<1x8x32xf32, #tpu.memory_space<vmem>>, vector<1x8x32xf32>,
    return
  }
  func.func @transform_0(%arg0: i32, %arg1: i32) -> (i32, i32, i32) {
    %c0_i32 = arith.constant 0 : i32
    %c0_i32_0 = arith.constant 0 : i32
    return %arg0, %arg1, %c0_i32 : i32, i32, i32
  }
  func.func @transform_1(%arg0: i32, %arg1: i32) -> (i32, i32, i32) {
    %c0_i32 = arith.constant 0 : i32
    %c0_i32_0 = arith.constant 0 : i32
    return %arg0, %arg1, %c0_i32 : i32, i32, i32
  }
  func.func @transform_2(%arg0: i32, %arg1: i32) -> (i32, i32, i32) {
    %c0_i32 = arith.constant 0 : i32
    %c0_i32_0 = arith.constant 0 : i32
    return %arg0, %arg1, %c0_i32 : i32, i32, i32
  }
  func.func @transform_3(%arg0: i32, %arg1: i32) -> (i32, i32, i32) {
    %c0_i32 = arith.constant 0 : i32
    %c0_i32_0 = arith.constant 0 : i32
    return %arg0, %arg1, %c0_i32 : i32, i32, i32
  }
  func.func @transform_4(%arg0: i32, %arg1: i32) -> (i32, i32, i32) {
    %c0_i32 = arith.constant 0 : i32
    %c0_i32_0 = arith.constant 0 : i32
    return %arg0, %arg1, %c0_i32 : i32, i32, i32
  }
}

</mosaic_0001>

<llo_original>
// kernel: tpu_custom_call.1
$region0: #{tpu_custom_call.1}
  #allocation0 [shape = 'u32[]', space=smem, size = 0x4, offset = 0x4, fixed_abs, tag = 'smem constant byte address 0x4 - core index']
  #allocation1 [shape = 'u32[144,128]{1,0:T(1,128)}', space=vmem, size = 0x12000, scoped, tag = 'internal scratch']
  %s0 = inlined_call_operand.vmem [shape: f32[2,8,32], index: 0, kind: input, shape index: {}]
  %s1 = inlined_call_operand.vmem [shape: f32[2,8,32], index: 1, kind: input, shape index: {}]
  %s2 = inlined_call_operand.vmem [shape: f32[2,8,1], index: 2, kind: input, shape index: {}]
  %s3 = inlined_call_operand.vmem [shape: f32[2,8,1], index: 3, kind: input, shape index: {}]
  %s4 = inlined_call_operand.hbm [shape: f32[2,8,32], index: 4, kind: output, shape index: {}]
  %s5 = sld [smem:[#allocation0]]
  $region49: #{tpu_custom_call.1} parent=0
    _
  %s7 = ssub.s32 1, %s5
  %s8 = scalar_select 0, %s7, %s5
  $region1: #{tpu_custom_call.1} parent=0
    #allocation2 [shape = 'u8[8192]{0}', space=vmem, size = 0x2000, scoped, tag = 'output window, operand 0']
    #allocation3 [shape = 's32[2]{0}', space=sflag, size = 0x8, scoped, tag = 'scoped memory for tpu_custom_call.1']
    %9 = vsyncpa [#allocation3], 0
    %s10 = scalar_lea.sflag [#allocation3], 1
    %11 = vsyncpa %s10, 0
    loop: start=0, step=1, limit=4
    $region2: #{tpu_custom_call.1} parent=1 // loop_pre_header
      _
    $region3: #{tpu_custom_call.1} parent=1 // loop_header
      %s13 = sphi 0, %s17
      %p14 = scmp.ge.s32.totalorder %s13, 4
      %s20 = sphi 0, %s32
      %s21 = sphi 0, %s28
      %s22 = sphi 0, %s20
      %s23 = sphi 0, %s21
      %s24 = sphi 0, %s22
      %s25 = sphi 0, %s23
      %s37 = sphi 0, %s39
      %s40 = sphi 0, %s37
      %s41 = sphi 0, %s40
      %s57 = sphi 0, %s41
      %s65 = sphi 0, %s67
      %s68 = sphi 0, %s65
      %s69 = sphi 0, %s68
      %s85 = sphi 0, %s69
      %s93 = sphi 0, %s95
      %s96 = sphi 0, %s93
      %s97 = sphi 0, %s96
      %s113 = sphi 0, %s97
      %s121 = sphi 0, %s123
      %s124 = sphi 0, %s121
      %s125 = sphi 0, %s124
      %s141 = sphi 0, %s125
      %s149 = sphi 0, %s151
      %s152 = sphi 0, %s149
      %s153 = sphi 0, %s152
      %s169 = sphi 0, %s153
    $region4: #{tpu_custom_call.1} parent=1 // loop_header_branch
      %16 = sbr.rel (%p14) target = $region8
    $region5: #{tpu_custom_call.1} parent=1 // loop_body
      %s18 = ssub.s32 %s13, 1
      %s19 = ssub.s32 %s13, 2
      %s26 = sadd.s32 1, %s21
      %p27 = scmp.ge.s32.totalorder %s26, 1
      %s28 = scalar_select %p27, 0, %s26
      %s29 = sadd.s32 1, %s20
      %s30 = scalar_select %p27, %s29, %s20
      %p31 = scmp.ge.s32.totalorder %s30, 2
      %s32 = scalar_select %p31, 0, %s30
      %s33 = ssub.s32 %s20, %s32
      %s34 = ssub.s32 %s21, %s28
      %s35 = sor.u32 %s33, %s34
      %p36 = scmp.eq.s32.totalorder %s35, 0
      %s38 = sadd.s32 %s37, 1
      %s39 = scalar_select %p36, %s37, %s38
      %p42 = pneg %p36
      %p43 = scmp.eq.s32.totalorder %s13, 1
      %p44 = por %p42, %p43
      %p45 = scmp.ne.s32.totalorder %s37, %s40
      %p46 = scmp.eq.s32.totalorder %s13, 0
      %p47 = por %p45, %p46
      %p48 = scmp.ne.s32.totalorder %s37, %s40
      %p49 = scmp.eq.s32.totalorder %s18, 1
      %p50 = por %p48, %p49
      %p51 = scmp.ne.s32.totalorder %s40, %s41
      %p52 = scmp.eq.s32.totalorder %s18, 0
      %p53 = por %p51, %p52
      %p54 = scmp.ne.s32.totalorder %s40, %s41
      %p55 = scmp.eq.s32.totalorder %s19, 1
      %p56 = por %p54, %p55
      %p58 = scmp.ne.s32.totalorder %s41, %s57
      %p59 = scmp.eq.s32.totalorder %s19, 0
      %p60 = por %p58, %p59
      %s61 = ssub.s32 %s20, %s32
      %s62 = ssub.s32 %s21, %s28
      %s63 = sor.u32 %s61, %s62
      %p64 = scmp.eq.s32.totalorder %s63, 0
      %s66 = sadd.s32 %s65, 1
      %s67 = scalar_select %p64, %s65, %s66
      %p70 = pneg %p64
      %p71 = scmp.eq.s32.totalorder %s13, 1
      %p72 = por %p70, %p71
      %p73 = scmp.ne.s32.totalorder %s65, %s68
      %p74 = scmp.eq.s32.totalorder %s13, 0
      %p75 = por %p73, %p74
      %p76 = scmp.ne.s32.totalorder %s65, %s68
      %p77 = scmp.eq.s32.totalorder %s18, 1
      %p78 = por %p76, %p77
      %p79 = scmp.ne.s32.totalorder %s68, %s69
      %p80 = scmp.eq.s32.totalorder %s18, 0
      %p81 = por %p79, %p80
      %p82 = scmp.ne.s32.totalorder %s68, %s69
      %p83 = scmp.eq.s32.totalorder %s19, 1
      %p84 = por %p82, %p83
      %p86 = scmp.ne.s32.totalorder %s69, %s85
      %p87 = scmp.eq.s32.totalorder %s19, 0
      %p88 = por %p86, %p87
      %s89 = ssub.s32 %s20, %s32
      %s90 = ssub.s32 %s21, %s28
      %s91 = sor.u32 %s89, %s90
      %p92 = scmp.eq.s32.totalorder %s91, 0
      %s94 = sadd.s32 %s93, 1
      %s95 = scalar_select %p92, %s93, %s94
      %p98 = pneg %p92
      %p99 = scmp.eq.s32.totalorder %s13, 1
      %p100 = por %p98, %p99
      %p101 = scmp.ne.s32.totalorder %s93, %s96
      %p102 = scmp.eq.s32.totalorder %s13, 0
      %p103 = por %p101, %p102
      %p104 = scmp.ne.s32.totalorder %s93, %s96
      %p105 = scmp.eq.s32.totalorder %s18, 1
      %p106 = por %p104, %p105
      %p107 = scmp.ne.s32.totalorder %s96, %s97
      %p108 = scmp.eq.s32.totalorder %s18, 0
      %p109 = por %p107, %p108
      %p110 = scmp.ne.s32.totalorder %s96, %s97
      %p111 = scmp.eq.s32.totalorder %s19, 1
      %p112 = por %p110, %p111
      %p114 = scmp.ne.s32.totalorder %s97, %s113
      %p115 = scmp.eq.s32.totalorder %s19, 0
      %p116 = por %p114, %p115
      %s117 = ssub.s32 %s20, %s32
      %s118 = ssub.s32 %s21, %s28
      %s119 = sor.u32 %s117, %s118
      %p120 = scmp.eq.s32.totalorder %s119, 0
      %s122 = sadd.s32 %s121, 1
      %s123 = scalar_select %p120, %s121, %s122
      %p126 = pneg %p120
      %p127 = scmp.eq.s32.totalorder %s13, 1
      %p128 = por %p126, %p127
      %p129 = scmp.ne.s32.totalorder %s121, %s124
      %p130 = scmp.eq.s32.totalorder %s13, 0
      %p131 = por %p129, %p130
      %p132 = scmp.ne.s32.totalorder %s121, %s124
      %p133 = scmp.eq.s32.totalorder %s18, 1
      %p134 = por %p132, %p133
      %p135 = scmp.ne.s32.totalorder %s124, %s125
      %p136 = scmp.eq.s32.totalorder %s18, 0
      %p137 = por %p135, %p136
      %p138 = scmp.ne.s32.totalorder %s124, %s125
      %p139 = scmp.eq.s32.totalorder %s19, 1
      %p140 = por %p138, %p139
      %p142 = scmp.ne.s32.totalorder %s125, %s141
      %p143 = scmp.eq.s32.totalorder %s19, 0
      %p144 = por %p142, %p143
      %s145 = ssub.s32 %s20, %s32
      %s146 = ssub.s32 %s21, %s28
      %s147 = sor.u32 %s145, %s146
      %p148 = scmp.eq.s32.totalorder %s147, 0
      %s150 = sadd.s32 %s149, 1
      %s151 = scalar_select %p148, %s149, %s150
      %p154 = pneg %p148
      %p155 = scmp.eq.s32.totalorder %s13, 1
      %p156 = por %p154, %p155
      %p157 = scmp.ne.s32.totalorder %s149, %s152
      %p158 = scmp.eq.s32.totalorder %s13, 0
      %p159 = por %p157, %p158
      %p160 = scmp.ne.s32.totalorder %s149, %s152
      %p161 = scmp.eq.s32.totalorder %s18, 1
      %p162 = por %p160, %p161
      %p163 = scmp.ne.s32.totalorder %s152, %s153
      %p164 = scmp.eq.s32.totalorder %s18, 0
      %p165 = por %p163, %p164
      %p166 = scmp.ne.s32.totalorder %s152, %s153
      %p167 = scmp.eq.s32.totalorder %s19, 1
      %p168 = por %p166, %p167
      %p170 = scmp.ne.s32.totalorder %s153, %s169
      %p171 = scmp.eq.s32.totalorder %s19, 0
      %p172 = por %p170, %p171
      %p173 = scmp.le.s32.totalorder 1, %s13
      %p174 = scmp.lt.s32.totalorder %s13, 3
      %p175 = pnand %p173, %p174
      %p176 = pneg %p175
      // Predicated region
      $region9: #{tpu_custom_call.1} parent=5 // pred_check
        _
      $region10: #{tpu_custom_call.1} parent=5 // pred_check_branch
        %178 = sbr.rel (%p175) target = $region12
      $region11: #{tpu_custom_call.1} parent=5 // pred_region
        %s179 = ssub.s32 %s13, 1
      $region12: #{tpu_custom_call.1} parent=5 // pred_fallthru
        _
      %p180 = scmp.lt.s32.totalorder %s13, 2
      // Predicated region
      $region13: #{tpu_custom_call.1} parent=5 // pred_check
        %p181 = pneg %p180
      $region14: #{tpu_custom_call.1} parent=5 // pred_check_branch
        %183 = sbr.rel (%p181) target = $region16
      $region15: #{tpu_custom_call.1} parent=5 // pred_region
        // Predicated region
        $region17: #{tpu_custom_call.1} parent=15 // pred_check
          %p184 = pneg %p47
        $region18: #{tpu_custom_call.1} parent=15 // pred_check_branch
          %186 = sbr.rel (%p184) target = $region20
        $region19: #{tpu_custom_call.1} parent=15 // pred_region
          %p187 = scmp.lt.s32.totalorder %s20, 1
          %s188 = scalar_select %p187, %s20, 1
          %p189 = scmp.lt.s32.totalorder %s21, 0
          %s190 = scalar_select %p189, %s21, 0
          %s191 = sadd.s32 %s190, %s188
          %s192 = smul.addr %s191, 8
          %s193 = scalar_lea.vmem %s0, %s192
        $region20: #{tpu_custom_call.1} parent=15 // pred_fallthru
          _
        // Predicated region
        $region21: #{tpu_custom_call.1} parent=15 // pred_check
          %p194 = pneg %p75
        $region22: #{tpu_custom_call.1} parent=15 // pred_check_branch
          %196 = sbr.rel (%p194) target = $region24
        $region23: #{tpu_custom_call.1} parent=15 // pred_region
          %p197 = scmp.lt.s32.totalorder %s20, 1
          %s198 = scalar_select %p197, %s20, 1
          %p199 = scmp.lt.s32.totalorder %s21, 0
          %s200 = scalar_select %p199, %s21, 0
          %s201 = sadd.s32 %s200, %s198
          %s202 = smul.addr %s201, 8
          %s203 = scalar_lea.vmem %s1, %s202
        $region24: #{tpu_custom_call.1} parent=15 // pred_fallthru
          _
        // Predicated region
        $region25: #{tpu_custom_call.1} parent=15 // pred_check
          %p204 = pneg %p103
        $region26: #{tpu_custom_call.1} parent=15 // pred_check_branch
          %206 = sbr.rel (%p204) target = $region28
        $region27: #{tpu_custom_call.1} parent=15 // pred_region
          %p207 = scmp.lt.s32.totalorder %s20, 1
          %s208 = scalar_select %p207, %s20, 1
          %p209 = scmp.lt.s32.totalorder %s21, 0
          %s210 = scalar_select %p209, %s21, 0
          %s211 = sadd.s32 %s210, %s208
          %s212 = smul.addr %s211, 8
          %s213 = scalar_lea.vmem %s2, %s212
        $region28: #{tpu_custom_call.1} parent=15 // pred_fallthru
          _
        // Predicated region
        $region29: #{tpu_custom_call.1} parent=15 // pred_check
          %p214 = pneg %p131
        $region30: #{tpu_custom_call.1} parent=15 // pred_check_branch
          %216 = sbr.rel (%p214) target = $region32
        $region31: #{tpu_custom_call.1} parent=15 // pred_region
          %p217 = scmp.lt.s32.totalorder %s20, 1
          %s218 = scalar_select %p217, %s20, 1
          %p219 = scmp.lt.s32.totalorder %s21, 0
          %s220 = scalar_select %p219, %s21, 0
          %s221 = sadd.s32 %s220, %s218
          %s222 = smul.addr %s221, 8
          %s223 = scalar_lea.vmem %s3, %s222
        $region32: #{tpu_custom_call.1} parent=15 // pred_fallthru
          _
      $region16: #{tpu_custom_call.1} parent=5 // pred_fallthru
        _
      %p224 = scmp.le.s32.totalorder 1, %s13
      %p225 = scmp.lt.s32.totalorder %s13, 3
      %p226 = pnand %p224, %p225
      %p227 = pneg %p226
      // Predicated region
      $region33: #{tpu_custom_call.1} parent=5 // pred_check
        _
      $region34: #{tpu_custom_call.1} parent=5 // pred_check_branch
        %229 = sbr.rel (%p226) target = $region36
      $region35: #{tpu_custom_call.1} parent=5 // pred_region
        %s230 = ssub.s32 %s13, 1
        %p231 = scmp.lt.s32.totalorder %s22, 1
        %s232 = scalar_select %p231, %s22, 1
        %p233 = scmp.lt.s32.totalorder %s23, 0
        %s234 = scalar_select %p233, %s23, 0
        %s235 = sadd.s32 %s234, %s232
        %s236 = smul.addr %s235, 8
        %s237 = scalar_lea.vmem %s0, %s236
        %p238 = pneg %p53
        %p239 = pneg %p50
        %p240 = scmp.lt.s32.totalorder %s22, 1
        %s241 = scalar_select %p240, %s22, 1
        %p242 = scmp.lt.s32.totalorder %s23, 0
        %s243 = scalar_select %p242, %s23, 0
        %s244 = sadd.s32 %s243, %s241
        %s245 = smul.addr %s244, 8
        %s246 = scalar_lea.vmem %s1, %s245
        %p247 = pneg %p81
        %p248 = pneg %p78
        %p249 = scmp.lt.s32.totalorder %s22, 1
        %s250 = scalar_select %p249, %s22, 1
        %p251 = scmp.lt.s32.totalorder %s23, 0
        %s252 = scalar_select %p251, %s23, 0
        %s253 = sadd.s32 %s252, %s250
        %s254 = smul.addr %s253, 8
        %s255 = scalar_lea.vmem %s2, %s254
        %p256 = pneg %p109
        %p257 = pneg %p106
        %p258 = scmp.lt.s32.totalorder %s22, 1
        %s259 = scalar_select %p258, %s22, 1
        %p260 = scmp.lt.s32.totalorder %s23, 0
        %s261 = scalar_select %p260, %s23, 0
        %s262 = sadd.s32 %s261, %s259
        %s263 = smul.addr %s262, 8
        %s264 = scalar_lea.vmem %s3, %s263
        %p265 = pneg %p137
        %p266 = pneg %p134
        %p267 = pneg %p165
        %p268 = pneg %p162
        %s269 = sand.u32 %s152, 1
        %s270 = scalar_lea.sflag [#allocation3], %s269
        %s271 = sand.u32 %s152, 1
        %s272 = smul.addr %s271, 8
        %s273 = scalar_lea.vmem [#allocation2], %s272
        %p274 = scmp.lt.s32.totalorder %s22, 1
        %s275 = scalar_select %p274, %s22, 1
        %p276 = scmp.lt.s32.totalorder %s23, 0
        %s277 = scalar_select %p276, %s23, 0
        %s278 = sadd.s32 %s277, %s275
        %s279 = smul.addr %s278, 8
        %s280 = scalar_lea.vmem %s0, %s279
        %p281 = scmp.lt.s32.totalorder %s22, 1
        %s282 = scalar_select %p281, %s22, 1
        %p283 = scmp.lt.s32.totalorder %s23, 0
        %s284 = scalar_select %p283, %s23, 0
        %s285 = sadd.s32 %s284, %s282
        %s286 = smul.addr %s285, 8
        %s287 = scalar_lea.vmem %s1, %s286
        %p288 = scmp.lt.s32.totalorder %s22, 1
        %s289 = scalar_select %p288, %s22, 1
        %p290 = scmp.lt.s32.totalorder %s23, 0
        %s291 = scalar_select %p290, %s23, 0
        %s292 = sadd.s32 %s291, %s289
        %s293 = smul.addr %s292, 8
        %s294 = scalar_lea.vmem %s2, %s293
        %p295 = scmp.lt.s32.totalorder %s22, 1
        %s296 = scalar_select %p295, %s22, 1
        %p297 = scmp.lt.s32.totalorder %s23, 0
        %s298 = scalar_select %p297, %s23, 0
        %s299 = sadd.s32 %s298, %s296
        %s300 = smul.addr %s299, 8
        %s301 = scalar_lea.vmem %s3, %s300
        %v302 = vld [vmem:[%s280] sm:$0xff]
        %v303 = vld [vmem:[%s287] sm:$0xff]
        %v304 = vld [vmem:[%s294] sm:$0xff]
        %306 = vset.pattern.permute.xlu0 0
        %307 = vperm.xlu0 %306, %v304
        %v308 = vpop.permute.xlu0 %307
        %v310 = vmul.f32 %v302, %v308
        %v311 = vld [vmem:[%s301] sm:$0xff]
        %313 = vset.pattern.permute.xlu0 0
        %314 = vperm.xlu0 %313, %v311
        %v315 = vpop.permute.xlu0 %314
        %v317 = vmul.f32 %v303, %v315
        %v318 = vadd.f32 %v310, %v317
        %vm319 = vcmask 261120
        %320 = vst.msk [vmem:[%s273] sm:$0xff] %vm319, %v318
        %s321 = sand.u32 %s152, 1
        %s322 = scalar_lea.sflag [#allocation3], %s321
        %s323 = sand.u32 %s152, 1
        %s324 = smul.addr %s323, 8
        %s325 = scalar_lea.vmem [#allocation2], %s324
        // Predicated region
        $region37: #{tpu_custom_call.1} parent=35 // pred_check
          %p326 = pneg %p162
        $region38: #{tpu_custom_call.1} parent=35 // pred_check_branch
          %328 = sbr.rel (%p326) target = $region40
        $region39: #{tpu_custom_call.1} parent=35 // pred_region
          %s330 = ssub.s32 128, 128
          %331 = vsyncadd %s322, %s330
          %s332 = sadd.s32 %s23, %s22
          %s333 = smul.addr %s332, 128
          %s334 = scalar_lea.hbm %s4, %s333
          %s336 = sshll.u32 %s325, 4
          %s337 = int_to_ptr.vmem [resolvable:$true] %s336
          %339 = dma.vmem_to_hbm [thread:$0]  %s337, 128, %s334, %s322
        $region40: #{tpu_custom_call.1} parent=35 // pred_fallthru
          _
      $region36: #{tpu_custom_call.1} parent=5 // pred_fallthru
        _
      %p340 = scmp.le.s32.totalorder 2, %s13
      // Predicated region
      $region41: #{tpu_custom_call.1} parent=5 // pred_check
        %p341 = pneg %p340
      $region42: #{tpu_custom_call.1} parent=5 // pred_check_branch
        %343 = sbr.rel (%p341) target = $region44
      $region43: #{tpu_custom_call.1} parent=5 // pred_region
        %s344 = ssub.s32 %s13, 2
        // Predicated region
        $region45: #{tpu_custom_call.1} parent=43 // pred_check
          %p345 = pneg %p168
        $region46: #{tpu_custom_call.1} parent=43 // pred_check_branch
          %347 = sbr.rel (%p345) target = $region48
        $region47: #{tpu_custom_call.1} parent=43 // pred_region
          %s348 = sand.u32 %s153, 1
          %s349 = scalar_lea.sflag [#allocation3], %s348
          %s350 = sand.u32 %s153, 1
          %s351 = smul.addr %s350, 8
          %s352 = scalar_lea.vmem [#allocation2], %s351
          %353 = dma.done %s349, 128
        $region48: #{tpu_custom_call.1} parent=43 // pred_fallthru
          _
      $region44: #{tpu_custom_call.1} parent=5 // pred_fallthru
        _
    $region6: #{tpu_custom_call.1} parent=1 // loop_footer
      %s17 = sadd.s32 1, %s13
    $region7: #{tpu_custom_call.1} parent=1 // loop_footer_branch
      %12 = sbr.rel target = $region3
    $region8: #{tpu_custom_call.1} parent=1 // loop_exit
      _
    %354 = vsyncpa [#allocation3], 1
    %s355 = scalar_lea.sflag [#allocation3], 1
    %356 = vsyncpa %s355, 1

</llo_original>
